<compile_context>
chip_gen: v5e
topology: v5e:2x2
jax: 0.10.0
libtpu: 0.0.40
codegen_flags: <defaults>
</compile_context>

<pallas_src>
import jax
import jax.numpy as jnp
import numpy as np
from jax.experimental import pallas as pl
from jax.experimental.pallas import tpu as pltpu


# ----------------------------- Pallas kernel ------------------------------- #
def _make_kernel(needs_mask: bool, n_rem: int):
    """needs_mask/n_rem are static Python values baked into the kernel."""

    def kernel(batch_ref, x_ref, out_ref, cnt_ref):
        g = pl.program_id(0)                 # graph-tile index ("parallel")
        i = pl.program_id(1)                 # node-tile index ("arbitrary" reduction)
        last = pl.num_programs(1) - 1

        @pl.when(i == 0)
        def _init():
            out_ref[...] = jnp.zeros_like(out_ref)   # out block doubles as accumulator
            cnt_ref[...] = jnp.zeros_like(cnt_ref)

        tg = out_ref.shape[0]
        tn = x_ref.shape[0]

        b = batch_ref[...]                                        # (1, tn) int32, pad = -1
        gids = jax.lax.broadcasted_iota(jnp.int32, (tg, tn), 0) + g * tg
        eq = gids == b                                            # (tg, tn) bool
        onehot = eq.astype(jnp.bfloat16)                          # exact 0/1 in bf16

        x = x_ref[...]                                            # (tn, D)
        if needs_mask:
            # Tail block of un-padded x: zero the out-of-range rows so garbage/NaN
            # in HBM past the array end cannot poison the matmul (0*NaN = NaN).
            row = jax.lax.broadcasted_iota(jnp.int32, (tn, 1), 0)
            valid = jnp.where(i == last, n_rem, tn)
            x = jnp.where(row < valid, x, 0)

        # Scatter-add as single-pass bf16 MXU matmuls with f32 accumulation.
        if x.dtype == jnp.bfloat16:
            out_ref[...] += jnp.dot(onehot, x, preferred_element_type=jnp.float32)
        else:
            # hi/lo bf16 split keeps f32-level accuracy at 2 MXU passes (vs ~6 for HIGHEST).
            xf = x.astype(jnp.float32)
            x_hi = xf.astype(jnp.bfloat16)
            x_lo = (xf - x_hi.astype(jnp.float32)).astype(jnp.bfloat16)
            out_ref[...] += (jnp.dot(onehot, x_hi, preferred_element_type=jnp.float32)
                             + jnp.dot(onehot, x_lo, preferred_element_type=jnp.float32))

        # Per-graph node counts (XLU row-sum; padded batch ids of -1 match nothing).
        cnt_ref[...] += jnp.sum(eq.astype(jnp.float32), axis=1, keepdims=True)

        @pl.when(i == last)
        def _finalize():
            out_ref[...] = out_ref[...] / jnp.maximum(cnt_ref[...], 1.0)

    return kernel


# ------------------------------ wrapper ------------------------------------ #
def global_mean_pool(x_node_features, batch_vector, num_graphs, *,
                     max_tile=1024, graph_tile=128):
    """scatter_mean(x_node_features, batch_vector, dim=0) with `num_graphs` segments."""
    n, d = x_node_features.shape

    # Graph-axis tiling: pad G to a multiple of 8 (sublane-aligned); tile at 128 when large.
    if num_graphs <= graph_tile:
        g_pad = max(8, ((num_graphs + 7) // 8) * 8)
        tg = g_pad
    else:
        tg = graph_tile
        g_pad = ((num_graphs + tg - 1) // tg) * tg

    # Node-axis tiling: whole node set when small (single reduction step),
    # else max_tile-row reduction tiles.
    tn = n if n <= max_tile else max_tile
    n_steps = (n + tn - 1) // tn
    n_pad = n_steps * tn
    n_rem = n - (n_steps - 1) * tn
    needs_mask = n_pad != n

    # Pad only the cheap int32 batch vector; x stays un-padded in HBM.
    batch_i32 = batch_vector.astype(jnp.int32)
    if needs_mask:
        batch_i32 = jnp.pad(batch_i32, (0, n_pad - n), constant_values=-1)
    batch2d = batch_i32.reshape(1, n_pad)

    kernel = _make_kernel(needs_mask, n_rem)

    out = pl.pallas_call(
        kernel,
        out_shape=jax.ShapeDtypeStruct((g_pad, d), jnp.float32),
        grid_spec=pltpu.PrefetchScalarGridSpec(
            num_scalar_prefetch=0,
            grid=(g_pad // tg, n_steps),
            in_specs=[pl.BlockSpec((1, tn), lambda g, i: (0, i)),     # batch ids
                      pl.BlockSpec((tn, d), lambda g, i: (i, 0))],    # node features
            out_specs=pl.BlockSpec((tg, d), lambda g, i: (g, 0)),     # resident across i
            scratch_shapes=[pltpu.VMEM((tg, 1), jnp.float32)],        # per-graph counts
        ),
        compiler_params=pltpu.CompilerParams(
            dimension_semantics=("parallel", "arbitrary")),
    )(batch2d, x_node_features)

    return out[:num_graphs].astype(x_node_features.dtype)


# ------------------------------ reference ----------------------------------- #
def reference_global_mean_pool(x, batch, num_graphs):
    sums = jax.ops.segment_sum(x, batch, num_segments=num_graphs)
    cnts = jax.ops.segment_sum(jnp.ones((x.shape[0],), x.dtype), batch,
                               num_segments=num_graphs)
    return sums / jnp.maximum(cnts, 1.0)[:, None]


if __name__ == "__main__":
    N_NODES, FEAT_DIM, NUM_GRAPHS = 64, 128, 4          # small, lane-dense feature dim

    key = jax.random.PRNGKey(0)
    k_x, k_b = jax.random.split(key)
    x = jax.random.normal(k_x, (N_NODES, FEAT_DIM), jnp.float32)
    # Typical PyG-style batch vector (sorted graph ids); kernel does not require sortedness.
    batch_vector = jnp.sort(
        jax.random.randint(k_b, (N_NODES,), 0, NUM_GRAPHS, jnp.int32))

    pooled = global_mean_pool(x, batch_vector, NUM_GRAPHS)
    jax.block_until_ready(pooled)

    ref = reference_global_mean_pool(x, batch_vector, NUM_GRAPHS)
    np.testing.assert_allclose(np.asarray(pooled), np.asarray(ref),
                               rtol=1e-5, atol=1e-5)

    print("KERNEL_OK")
</pallas_src>

<mosaic_0001>
module attributes {stable_mosaic.version = 11 : i64} {
  func.func @kernel(%arg0: i32, %arg1: i32, %arg2: memref<1x64xi32, #tpu.memory_space<vmem>>, %arg3: memref<64x128xf32, #tpu.memory_space<vmem>>, %arg4: memref<8x128xf32, #tpu.memory_space<vmem>>, %arg5: memref<8x1xf32, #tpu.memory_space<vmem>>) attributes {dimension_semantics = [#tpu.dimension_semantics<parallel>, #tpu.dimension_semantics<arbitrary>], iteration_bounds = array<i64: 1, 1>, scalar_prefetch = 0 : i64, scratch_operands = 1 : i64, tpu.core_type = #tpu.core_type<tc>, window_params = [{transform_indices = @transform_0, window_bounds = array<i64: 1, 64>}, {transform_indices = @transform_1, window_bounds = array<i64: 64, 128>}, {transform_indices = @transform_2, window_bounds = array<i64: 8, 128>}]} {
    %c0_i32 = arith.constant 0 : i32
    %0 = arith.cmpi eq, %arg1, %c0_i32 : i32
    %1 = arith.extui %0 : i1 to i32
    %c0_i32_0 = arith.constant 0 : i32
    %2 = arith.cmpi ne, %1, %c0_i32_0 : i32
    scf.if %2 {
      %cst_16 = arith.constant 0.000000e+00 : f32
      %34 = vector.broadcast %cst_16 : f32 to vector<8x128xf32>
      %c0_17 = arith.constant 0 : index
      %c0_18 = arith.constant 0 : index
      %35 = vector.load %arg4[%c0_17, %c0_18] : memref<8x128xf32, #tpu.memory_space<vmem>>, vector<8x128xf32>
      tpu.vector_store %arg4[%c0_17, %c0_18], %34 {strides = array<i32>} : memref<8x128xf32, #tpu.memory_space<vmem>>, vector<8x128xf32>,
      %cst_19 = arith.constant 0.000000e+00 : f32
      %36 = vector.broadcast %cst_19 : f32 to vector<8x1xf32>
      %c0_20 = arith.constant 0 : index
      %c0_21 = arith.constant 0 : index
      %37 = vector.load %arg5[%c0_20, %c0_21] : memref<8x1xf32, #tpu.memory_space<vmem>>, vector<8x1xf32>
      tpu.vector_store %arg5[%c0_20, %c0_21], %36 {strides = array<i32>} : memref<8x1xf32, #tpu.memory_space<vmem>>, vector<8x1xf32>,
    } else {
    }
    %c0 = arith.constant 0 : index
    %c0_1 = arith.constant 0 : index
    %3 = vector.load %arg2[%c0, %c0_1] : memref<1x64xi32, #tpu.memory_space<vmem>>, vector<1x64xi32>
    %4 = tpu.iota {dimensions = array<i32: 0>} : vector<8x64xi32>
    %c8_i32 = arith.constant 8 : i32
    %5 = arith.muli %arg0, %c8_i32 : i32
    %6 = vector.broadcast %5 : i32 to vector<8x64xi32>
    %7 = arith.addi %4, %6 : vector<8x64xi32>
    %8 = vector.broadcast %3 : vector<1x64xi32> to vector<8x64xi32>
    %9 = arith.cmpi eq, %7, %8 : vector<8x64xi32>
    %10 = arith.extui %9 : vector<8x64xi1> to vector<8x64xi32>
    %11 = arith.sitofp %10 : vector<8x64xi32> to vector<8x64xf32>
    %12 = arith.truncf %11 : vector<8x64xf32> to vector<8x64xbf16>
    %c0_2 = arith.constant 0 : index
    %c0_3 = arith.constant 0 : index
    %13 = vector.load %arg3[%c0_2, %c0_3] : memref<64x128xf32, #tpu.memory_space<vmem>>, vector<64x128xf32>
    %14 = arith.truncf %13 : vector<64x128xf32> to vector<64x128xbf16>
    %15 = arith.extf %14 : vector<64x128xbf16> to vector<64x128xf32>
    %16 = arith.subf %13, %15 : vector<64x128xf32>
    %17 = arith.truncf %16 : vector<64x128xf32> to vector<64x128xbf16>
    %c0_4 = arith.constant 0 : index
    %c0_5 = arith.constant 0 : index
    %18 = vector.load %arg4[%c0_4, %c0_5] : memref<8x128xf32, #tpu.memory_space<vmem>>, vector<8x128xf32>
    %cst = arith.constant dense<0.000000e+00> : vector<8x128xf32>
    %19 = tpu.matmul %12, %14, %cst {dimension_numbers = #tpu.dot_dimension_numbers<[1], [0], [0], [1], [0, 0, 1, 1], [], []>} : vector<8x64xbf16>, vector<64x128xbf16>, vector<8x128xf32> -> vector<8x128xf32>
    %cst_6 = arith.constant dense<0.000000e+00> : vector<8x128xf32>
    %20 = tpu.matmul %12, %17, %cst_6 {dimension_numbers = #tpu.dot_dimension_numbers<[1], [0], [0], [1], [0, 0, 1, 1], [], []>} : vector<8x64xbf16>, vector<64x128xbf16>, vector<8x128xf32> -> vector<8x128xf32>
    %21 = arith.addf %19, %20 : vector<8x128xf32>
    %22 = arith.addf %18, %21 : vector<8x128xf32>
    %c0_7 = arith.constant 0 : index
    %c0_8 = arith.constant 0 : index
    %23 = vector.load %arg4[%c0_7, %c0_8] : memref<8x128xf32, #tpu.memory_space<vmem>>, vector<8x128xf32>
    tpu.vector_store %arg4[%c0_7, %c0_8], %22 {strides = array<i32>} : memref<8x128xf32, #tpu.memory_space<vmem>>, vector<8x128xf32>,
    %c0_9 = arith.constant 0 : index
    %c0_10 = arith.constant 0 : index
    %24 = vector.load %arg5[%c0_9, %c0_10] : memref<8x1xf32, #tpu.memory_space<vmem>>, vector<8x1xf32>
    %25 = arith.extui %9 : vector<8x64xi1> to vector<8x64xi32>
    %26 = arith.sitofp %25 : vector<8x64xi32> to vector<8x64xf32>
    %cst_11 = arith.constant dense<0.000000e+00> : vector<8xf32>
    %27 = vector.multi_reduction <add>, %26, %cst_11 [1] : vector<8x64xf32> to vector<8xf32>
    %28 = vector.shape_cast %27 : vector<8xf32> to vector<8x1xf32>
    %29 = arith.addf %24, %28 : vector<8x1xf32>
    %c0_12 = arith.constant 0 : index
    %c0_13 = arith.constant 0 : index
    %30 = vector.load %arg5[%c0_12, %c0_13] : memref<8x1xf32, #tpu.memory_space<vmem>>, vector<8x1xf32>
    tpu.vector_store %arg5[%c0_12, %c0_13], %29 {strides = array<i32>} : memref<8x1xf32, #tpu.memory_space<vmem>>, vector<8x1xf32>,
    %c0_i32_14 = arith.constant 0 : i32
    %31 = arith.cmpi eq, %arg1, %c0_i32_14 : i32
    %32 = arith.extui %31 : i1 to i32
    %c0_i32_15 = arith.constant 0 : i32
    %33 = arith.cmpi ne, %32, %c0_i32_15 : i32
    scf.if %33 {
      %c0_16 = arith.constant 0 : index
      %c0_17 = arith.constant 0 : index
      %34 = vector.load %arg4[%c0_16, %c0_17] : memref<8x128xf32, #tpu.memory_space<vmem>>, vector<8x128xf32>
      %c0_18 = arith.constant 0 : index
      %c0_19 = arith.constant 0 : index
      %35 = vector.load %arg5[%c0_18, %c0_19] : memref<8x1xf32, #tpu.memory_space<vmem>>, vector<8x1xf32>
      %cst_20 = arith.constant 1.000000e+00 : f32
      %36 = vector.broadcast %cst_20 : f32 to vector<8x1xf32>
      %37 = arith.maximumf %35, %36 : vector<8x1xf32>
      %38 = vector.broadcast %37 : vector<8x1xf32> to vector<8x128xf32>
      %39 = arith.divf %34, %38 : vector<8x128xf32>
      %c0_21 = arith.constant 0 : index
      %c0_22 = arith.constant 0 : index
      %40 = vector.load %arg4[%c0_21, %c0_22] : memref<8x128xf32, #tpu.memory_space<vmem>>, vector<8x128xf32>
      tpu.vector_store %arg4[%c0_21, %c0_22], %39 {strides = array<i32>} : memref<8x128xf32, #tpu.memory_space<vmem>>, vector<8x128xf32>,
    } else {
    }
    return
  }
  func.func @transform_0(%arg0: i32, %arg1: i32) -> (i32, i32) {
    %c0_i32 = arith.constant 0 : i32
    %c0_i32_0 = arith.constant 0 : i32
    return %c0_i32, %arg1 : i32, i32
  }
  func.func @transform_1(%arg0: i32, %arg1: i32) -> (i32, i32) {
    %c0_i32 = arith.constant 0 : i32
    %c0_i32_0 = arith.constant 0 : i32
    return %arg1, %c0_i32 : i32, i32
  }
  func.func @transform_2(%arg0: i32, %arg1: i32) -> (i32, i32) {
    %c0_i32 = arith.constant 0 : i32
    %c0_i32_0 = arith.constant 0 : i32
    return %arg0, %c0_i32 : i32, i32
  }
}

</mosaic_0001>

<llo_original>
// kernel: tpu_custom_call.1
$region0: #{tpu_custom_call.1}
  #allocation0 [shape = 'u32[]', space=smem, size = 0x4, offset = 0x4, fixed_abs, tag = 'smem constant byte address 0x4 - core index']
  #allocation1 [shape = 'u32[72,128]{1,0:T(1,128)}', space=vmem, size = 0x9000, scoped, tag = 'internal scratch']
  #allocation2 [shape = 'f32[8,1]{1,0:T(8,128)}', space=vmem, size = 0x1000, scoped, tag = 'scratch operand']
  %s0 = inlined_call_operand.hbm [shape: s32[1,64], index: 0, kind: input, shape index: {}]
  %s1 = inlined_call_operand.hbm [shape: f32[64,128], index: 1, kind: input, shape index: {}]
  %s2 = inlined_call_operand.hbm [shape: f32[8,128], index: 2, kind: output, shape index: {}]
  %s3 = sld [smem:[#allocation0]]
  $region34: #{tpu_custom_call.1} parent=0
    _
  %s5 = ssub.s32 1, %s3
  %s6 = scalar_select 0, %s5, %s3
  $region1: #{tpu_custom_call.1} parent=0
    #allocation3 [shape = 'u8[512]{0}', space=vmem, size = 0x400, scoped, tag = 'input window, operand 0, single buffered']
    #allocation4 [shape = 's32[1]{0}', space=sflag, size = 0x4, scoped, tag = 'scoped memory for tpu_custom_call.1']
    #allocation5 [shape = 's32[1]{0}', space=sflag, size = 0x4, scoped, tag = 'scoped memory for tpu_custom_call.1']
    #allocation6 [shape = 'u8[32768]{0}', space=vmem, size = 0x8000, scoped, tag = 'input window, operand 1, single buffered']
    #allocation7 [shape = 's32[1]{0}', space=sflag, size = 0x4, scoped, tag = 'scoped memory for tpu_custom_call.1']
    #allocation8 [shape = 'u8[4096]{0}', space=vmem, size = 0x1000, scoped, tag = 'output window, operand 0, single buffered']
    %7 = vsyncpa [#allocation4], 0
    %8 = vsyncpa [#allocation7], 0
    %9 = vsyncpa [#allocation5], 0
    // Predicated region
    $region2: #{tpu_custom_call.1} parent=1 // pred_check
      _
    $region3: #{tpu_custom_call.1} parent=1 // pred_check_branch
      %11 = sbr.rel (0) target = $region5
    $region4: #{tpu_custom_call.1} parent=1 // pred_region
      %13 = vsyncadd [#allocation4], 0
      %s15 = sshll.u32 %s0, 4
      %s16 = int_to_ptr.hbm [resolvable:$true] %s15
      %s17 = sshll.u32 [#allocation3], 4
      %s18 = int_to_ptr.vmem [resolvable:$true] %s17
      %20 = dma.hbm_to_vmem [thread:$0]  %s16, 16, %s18, [#allocation4]
    $region5: #{tpu_custom_call.1} parent=1 // pred_fallthru
      _
    // Predicated region
    $region6: #{tpu_custom_call.1} parent=1 // pred_check
      _
    $region7: #{tpu_custom_call.1} parent=1 // pred_check_branch
      %22 = sbr.rel (0) target = $region9
    $region8: #{tpu_custom_call.1} parent=1 // pred_region
      %24 = vsyncadd [#allocation7], 0
      %s25 = sshll.u32 %s1, 4
      %s26 = int_to_ptr.hbm [resolvable:$true] %s25
      %s27 = sshll.u32 [#allocation6], 4
      %s28 = int_to_ptr.vmem [resolvable:$true] %s27
      %33 = dma.hbm_to_vmem [thread:$0]  %s26, 1024, %s28, [#allocation7], 128, 128, 8
    $region9: #{tpu_custom_call.1} parent=1 // pred_fallthru
      _
    // Predicated region
    $region10: #{tpu_custom_call.1} parent=1 // pred_check
      _
    $region11: #{tpu_custom_call.1} parent=1 // pred_check_branch
      %35 = sbr.rel (0) target = $region13
    $region12: #{tpu_custom_call.1} parent=1 // pred_region
      %37 = dma.done [#allocation4], 16
    $region13: #{tpu_custom_call.1} parent=1 // pred_fallthru
      _
    // Predicated region
    $region14: #{tpu_custom_call.1} parent=1 // pred_check
      _
    $region15: #{tpu_custom_call.1} parent=1 // pred_check_branch
      %39 = sbr.rel (0) target = $region17
    $region16: #{tpu_custom_call.1} parent=1 // pred_region
      %41 = dma.done [#allocation7], 1024
    $region17: #{tpu_custom_call.1} parent=1 // pred_fallthru
      _
    %p43 = scmp.eq.s32.totalorder 0, 0
    // Predicated region
    $region18: #{tpu_custom_call.1} parent=1 // pred_check
      %p44 = pneg %p43
    $region19: #{tpu_custom_call.1} parent=1 // pred_check_branch
      %46 = sbr.rel (%p44) target = $region21
    $region20: #{tpu_custom_call.1} parent=1 // pred_region
      %47 = vst [vmem:[#allocation8] sm:$0xff] 0.0
      %vm48 = vcmask 7168
      %49 = vst.msk [vmem:[#allocation2] sm:$0xff] %vm48, 0.0
    $region21: #{tpu_custom_call.1} parent=1 // pred_fallthru
      _
    %v50 = vld [vmem:[#allocation3] sm:$0x1]
    %v51 = vlaneseq
    %v52 = vshrl.u32 %v51, 7
    %s53 = smul.u32 0, 8
    %v54 = vstv %s53
    %v55 = vadd.s32 %v52, %v54
    %v56 = vperm.slane %v50, 0
    %vm57 = vcmp.eq.s32.totalorder %v55, %v56
    %v58 = vsel %vm57, 1, 0
    %v59 = vcvt.s32.f32 %v58
    %v60 = vpack.c.bf16 %v59, %v59
    %v61 = vld [vmem:[#allocation6] sm:$0xff]
    %v62 = vld [vmem:[#allocation6 + $0x8] sm:$0xff]
    %v63 = vld [vmem:[#allocation6 + $0x10] sm:$0xff]
    %v64 = vld [vmem:[#allocation6 + $0x18] sm:$0xff]
    %v65 = vld [vmem:[#allocation6 + $0x20] sm:$0xff]
    %v66 = vld [vmem:[#allocation6 + $0x28] sm:$0xff]
    %v67 = vld [vmem:[#allocation6 + $0x30] sm:$0xff]
    %v68 = vld [vmem:[#allocation6 + $0x38] sm:$0xff]
    %v69 = vpack.c.bf16 %v61, %v61
    %v70 = vpack.c.bf16 %v62, %v62
    %v71 = vpack.c.bf16 %v63, %v63
    %v72 = vpack.c.bf16 %v64, %v64
    %v73 = vpack.c.bf16 %v65, %v65
    %v74 = vpack.c.bf16 %v66, %v66
    %v75 = vpack.c.bf16 %v67, %v67
    %v76 = vpack.c.bf16 %v68, %v68
    %v77 = vunpack.c.l.bf16 %v69
    %v78 = vunpack.c.l.bf16 %v70
    %v79 = vunpack.c.l.bf16 %v71
    %v80 = vunpack.c.l.bf16 %v72
    %v81 = vunpack.c.l.bf16 %v73
    %v82 = vunpack.c.l.bf16 %v74
    %v83 = vunpack.c.l.bf16 %v75
    %v84 = vunpack.c.l.bf16 %v76
    %v85 = vsub.f32 %v61, %v77
    %v86 = vsub.f32 %v62, %v78
    %v87 = vsub.f32 %v63, %v79
    %v88 = vsub.f32 %v64, %v80
    %v89 = vsub.f32 %v65, %v81
    %v90 = vsub.f32 %v66, %v82
    %v91 = vsub.f32 %v67, %v83
    %v92 = vsub.f32 %v68, %v84
    %v93 = vpack.c.bf16 %v86, %v85
    %v94 = vpack.c.bf16 %v88, %v87
    %v95 = vpack.c.bf16 %v90, %v89
    %v96 = vpack.c.bf16 %v92, %v91
    %v97 = vld [vmem:[#allocation8] sm:$0xff]
    %vm98 = vcmask 523264
    %v100 = vsel %vm98, %v60, 0
    %102 = vmatpush.bf16.msra.mxu0 0
    %103 = vmatpush.bf16.msra.mxu0 0
    %104 = vmatpush.bf16.msra.mxu0 0
    %105 = vmatpush.bf16.msra.mxu0 0
    %106 = vmatpush.bf16.msra.mxu0 %v96
    %107 = vmatpush.bf16.msra.mxu0 %v95
    %108 = vmatpush.bf16.msra.mxu0 %v94
    %109 = vmatpush.bf16.msra.mxu0 %v93
    %110 = vmatmul.bf16.gmra.mxu0 %v100
    %v111 = vpop.f32.mrf.mxu0
    %v112 = vadd.f32 0.0, %v111
    %v113 = vpop.f32.mrf.mxu0
    %114 = vdwg.mxu0
    %v123 = vunpack.c.l.b16 %v69
    %v124 = vunpack.c.l.b16 %v70
    %v125 = vunpack.c.l.b16 %v71
    %v126 = vunpack.c.l.b16 %v72
    %v127 = vunpack.c.l.b16 %v73
    %v128 = vunpack.c.l.b16 %v74
    %v129 = vunpack.c.l.b16 %v75
    %v130 = vunpack.c.l.b16 %v76
    %v131 = vpack.c.b16 %v124, %v123
    %v132 = vpack.c.b16 %v126, %v125
    %v133 = vpack.c.b16 %v128, %v127
    %v134 = vpack.c.b16 %v130, %v129
    %139 = vmatpush.bf16.msra.mxu0 0
    %140 = vmatpush.bf16.msra.mxu0 0
    %141 = vmatpush.bf16.msra.mxu0 0
    %142 = vmatpush.bf16.msra.mxu0 0
    %143 = vmatpush.bf16.msra.mxu0 %v134
    %144 = vmatpush.bf16.msra.mxu0 %v133
    %145 = vmatpush.bf16.msra.mxu0 %v132
    %146 = vmatpush.bf16.msra.mxu0 %v131
    %147 = vmatmul.bf16.gmra.mxu0 %v100
    %v148 = vpop.f32.mrf.mxu0
    %v149 = vadd.f32 %v112, %v148
    %v150 = vpop.f32.mrf.mxu0
    %151 = vdwg.mxu0
    %v152 = vadd.f32 %v97, %v149
    %153 = vst [vmem:[#allocation8] sm:$0xff] %v152
    %v154 = vld [vmem:[#allocation2] sm:$0xff]
    %v155 = vsel %vm98, %v59, 0.0
    %156 = vadd.xlane.f32.xlu0 %v155
    %v157 = vpop.xlane.xlu0 %156
    %v158 = vadd.f32 %v154, %v157
    %vm159 = vcmask 7168
    %160 = vst.msk [vmem:[#allocation2] sm:$0xff] %vm159, %v158
    // Predicated region
    $region22: #{tpu_custom_call.1} parent=1 // pred_check
      %p161 = pneg %p43
    $region23: #{tpu_custom_call.1} parent=1 // pred_check_branch
      %163 = sbr.rel (%p161) target = $region25
    $region24: #{tpu_custom_call.1} parent=1 // pred_region
      %v164 = vld [vmem:[#allocation8] sm:$0xff]
      %v165 = vld [vmem:[#allocation2] sm:$0xff]
      %v166 = vmax.f32 %v165, 1.0
      %168 = vset.pattern.permute.xlu0 0
      %169 = vperm.xlu0 %168, %v166
      %v170 = vpop.permute.xlu0 %169
      %v172 = vrcp.pop %v170
      %v173 = vmul.f32 %v170, %v172
      %v174 = vsub.f32 1.0, %v173
      %v175 = vmul.f32 %v172, %v174
      %v176 = vadd.f32 %v172, %v175
      %vm177 = vweird.f32 %v170
      %vm178 = vweird.f32 %v172
      %vm179 = vmor %vm177, %vm178
      %v180 = vsel %vm179, %v172, %v176
      %v181 = vand.u32 2147483647, %v170
      %vm182 = vcmp.eq.f32.partialorder %v181, 8.507059e+37
      %v183 = vand.u32 %v170, 2147483648
      %v184 = vor.u32 1.1754944e-38, %v183
      %v185 = vsel %vm182, %v184, %v180
      %v186 = vmul.f32 %v164, %v185
      %187 = vst [vmem:[#allocation8] sm:$0xff] %v186
    $region25: #{tpu_custom_call.1} parent=1 // pred_fallthru
      _
    // Predicated region
    $region26: #{tpu_custom_call.1} parent=1 // pred_check
      _
    $region27: #{tpu_custom_call.1} parent=1 // pred_check_branch
      %189 = sbr.rel (0) target = $region29
    $region28: #{tpu_custom_call.1} parent=1 // pred_region
      %191 = vsyncadd [#allocation5], 0
      %s193 = sshll.u32 [#allocation8], 4
      %s194 = int_to_ptr.vmem [resolvable:$true] %s193
      %s195 = sshll.u32 %s2, 4
      %s196 = int_to_ptr.hbm [resolvable:$true] %s195
      %198 = dma.vmem_to_hbm [thread:$0]  %s194, 128, %s196, [#allocation5]
    $region29: #{tpu_custom_call.1} parent=1 // pred_fallthru
      _
    // Predicated region
    $region30: #{tpu_custom_call.1} parent=1 // pred_check
      _
    $region31: #{tpu_custom_call.1} parent=1 // pred_check_branch
      %200 = sbr.rel (0) target = $region33
    $region32: #{tpu_custom_call.1} parent=1 // pred_region
      %202 = dma.done [#allocation5], 128
    $region33: #{tpu_custom_call.1} parent=1 // pred_fallthru
      _
    %203 = vsyncpa [#allocation4], 1
    %204 = vsyncpa [#allocation7], 1
    %205 = vsyncpa [#allocation5], 1

</llo_original>
